<compile_context>
chip_gen: v6e
topology: v6e:2x2x1
jax: 0.10.0
libtpu: 0.0.40
codegen_flags: <defaults>
</compile_context>

<pallas_src>
import functools

import jax
import jax.numpy as jnp
from jax.experimental import pallas as pl
from jax.experimental.pallas import tpu as pltpu


def _round_up(x, k):
    return (x + k - 1) // k * k


def _lcnn_head_kernel(x_ref, w1_ref, b1_ref, w2_ref, b2_ref, out_ref, *, H, W):
    """One grid step = one batch element.

    x_ref  : (1, C, Lpad)           padded image, spatial flattened onto lanes
    w1_ref : (3m, 9*C)              fused 3x3 weights, columns ordered (dy,dx,c)
    b1_ref : (3m, 1)
    w2_ref : (total_out, 3m)        block-diagonal fused 1x1 weights
    b2_ref : (total_out, 1)
    out_ref: (1, total_out, H*(W+2))
    """
    Wp = W + 2
    Lout = H * Wp

    # im2col along K: each of the 9 taps is a contiguous lane-slice of the
    # flat padded slab (one-row wrap junk is cropped in the wrapper).
    taps = []
    for dy in range(3):
        for dx in range(3):
            delta = dy * Wp + dx
            taps.append(x_ref[0, :, pl.ds(delta, Lout)])       # (C, Lout)
    patch = jnp.concatenate(taps, axis=0)                      # (9C, Lout)

    # Fused 3x3 conv for all heads: single K=9C matmul, f32 accumulation.
    hid = jnp.dot(w1_ref[...], patch, preferred_element_type=jnp.float32)
    hid = jnp.maximum(hid + b1_ref[...], 0.0)                  # (3m, Lout)

    # Fused 1x1 convs (block-diagonal weights) + bias; lane-dense store.
    y = jnp.dot(w2_ref[...], hid, preferred_element_type=jnp.float32) + b2_ref[...]
    out_ref[0] = y.astype(out_ref.dtype)                       # (total_out, Lout)


def _pack_params(params):
    """Fuse the per-head conv weights (torch layouts) into single matrices."""
    w1_rows, b1s, w2_blocks, b2s, ms, ocs = [], [], [], [], [], []
    for (w1, b1, w2, b2) in params:
        m, C, _, _ = w1.shape
        oc = w2.shape[0]
        # torch (m, C, 3, 3) -> (m, 3, 3, C) -> (m, 9*C); col = (dy*3+dx)*C + c
        w1_rows.append(jnp.transpose(w1, (0, 2, 3, 1)).reshape(m, 9 * C))
        b1s.append(b1)
        w2_blocks.append(w2.reshape(oc, m))
        b2s.append(b2)
        ms.append(m)
        ocs.append(oc)
    w1_packed = jnp.concatenate(w1_rows, axis=0)                  # (sum_m, 9C)
    b1_packed = jnp.concatenate(b1s, axis=0)[:, None]             # (sum_m, 1)
    total_m, total_out = sum(ms), sum(ocs)
    w2_packed = jnp.zeros((total_out, total_m), jnp.float32)      # block diag
    r = c = 0
    for blk, m, oc in zip(w2_blocks, ms, ocs):
        w2_packed = w2_packed.at[r:r + oc, c:c + m].set(blk)
        r += oc
        c += m
    b2_packed = jnp.concatenate(b2s, axis=0)[:, None]             # (total_out, 1)
    return w1_packed, b1_packed, w2_packed, b2_packed


def lcnn_head_forward(x_nchw, params):
    """x_nchw: (N, C, H, W) f32; params: per-head torch-layout conv weights.

    Returns (N, sum(out_ch), H, W) f32, matching LCNNHead.forward.
    """
    N, C, H, W = x_nchw.shape
    w1_p, b1_p, w2_p, b2_p = _pack_params(params)
    total_out = w2_p.shape[0]

    Wp = W + 2
    L = (H + 2) * Wp
    Lout = H * Wp
    # Tail pad so every tap's lane-slice [delta, delta+Lout) stays in bounds
    # (max delta = 2*Wp + 2, so L + 2 suffices); round up to a lane multiple.
    Lpad = _round_up(L + 2, 128)

    # Input stays NCHW: pad spatially, flatten padded (H+2, W+2) onto lanes.
    xp = jnp.pad(x_nchw, ((0, 0), (0, 0), (1, 1), (1, 1)))
    x_flat = jnp.pad(xp.reshape(N, C, L), ((0, 0), (0, 0), (0, Lpad - L)))
    # (Optional v6e/v7x: cast x_flat / w1_p / w2_p to bf16 here; kept f32 for
    #  exact parity with the f32 reference.)

    kernel = functools.partial(_lcnn_head_kernel, H=H, W=W)
    out_flat = pl.pallas_call(
        kernel,
        out_shape=jax.ShapeDtypeStruct((N, total_out, Lout), jnp.float32),
        grid=(N,),
        in_specs=[
            pl.BlockSpec((1, C, Lpad), lambda n: (n, 0, 0)),
            pl.BlockSpec(w1_p.shape, lambda n: (0, 0)),
            pl.BlockSpec(b1_p.shape, lambda n: (0, 0)),
            pl.BlockSpec(w2_p.shape, lambda n: (0, 0)),
            pl.BlockSpec(b2_p.shape, lambda n: (0, 0)),
        ],
        out_specs=pl.BlockSpec((1, total_out, Lout), lambda n: (n, 0, 0)),
        compiler_params=pltpu.CompilerParams(
            dimension_semantics=("parallel",),
        ),
    )(x_flat, w1_p, b1_p, w2_p, b2_p)

    # (N, total_out, H, W+2) -> drop the 2 junk columns per row -> NCHW.
    # Reshape is free (contiguous); no channel transpose needed anywhere.
    return out_flat.reshape(N, total_out, H, Wp)[:, :, :, :W]


def lcnn_head_reference(x_nchw, params):
    """Pure-JAX reference of the same math (for the correctness check)."""
    N, C, H, W = x_nchw.shape
    xp = jnp.pad(x_nchw, ((0, 0), (0, 0), (1, 1), (1, 1)))
    outs = []
    for (w1, b1, w2, b2) in params:
        m = w1.shape[0]
        acc = jnp.zeros((N, m, H, W), jnp.float32)
        for dy in range(3):
            for dx in range(3):
                acc = acc + jnp.einsum(
                    "nchw,oc->nohw", xp[:, :, dy:dy + H, dx:dx + W], w1[:, :, dy, dx]
                )
        hid = jnp.maximum(acc + b1[None, :, None, None], 0.0)
        y = jnp.einsum("nmhw,om->nohw", hid, w2[:, :, 0, 0]) + b2[None, :, None, None]
        outs.append(y)
    return jnp.concatenate(outs, axis=1)


def make_params(key, input_channels, head_size=((2,), (2,), (1,))):
    """Deterministic synthetic params with torch Conv2d layouts (LCNNHead.__init__)."""
    m = input_channels // 4
    out_channels = [c for grp in head_size for c in grp]
    params = []
    for out_ch in out_channels:
        key, k1, k2, k3, k4 = jax.random.split(key, 5)
        w1 = jax.random.normal(k1, (m, input_channels, 3, 3), jnp.float32) * 0.1
        b1 = jax.random.normal(k2, (m,), jnp.float32) * 0.1
        w2 = jax.random.normal(k3, (out_ch, m, 1, 1), jnp.float32) * 0.1
        b2 = jax.random.normal(k4, (out_ch,), jnp.float32) * 0.1
        params.append((w1, b1, w2, b2))
    return params


if __name__ == "__main__":
    # Small shapes: batch=2, input_channels=16 (divisible by 4), 16x16 spatial.
    N, C, H, W = 2, 16, 16, 16
    head_size = ((2,), (2,), (1,))
    num_class = sum(c for g in head_size for c in g)   # 5

    key = jax.random.PRNGKey(0)
    kx, kp = jax.random.split(key)
    x = jax.random.normal(kx, (N, C, H, W), jnp.float32)
    params = make_params(kp, C, head_size)

    out = jax.block_until_ready(lcnn_head_forward(x, params))
    ref = jax.block_until_ready(lcnn_head_reference(x, params))

    assert out.shape == (N, num_class, H, W), out.shape
    max_err = float(jnp.max(jnp.abs(out - ref)))
    assert jnp.allclose(out, ref, atol=1e-4, rtol=1e-4), max_err
    print("KERNEL_OK")
</pallas_src>

<mosaic_0001>
module attributes {stable_mosaic.version = 11 : i64} {
  func.func @_lcnn_head_kernel(%arg0: i32, %arg1: memref<1x16x384xf32, #tpu.memory_space<vmem>>, %arg2: memref<12x144xf32, #tpu.memory_space<vmem>>, %arg3: memref<12x1xf32, #tpu.memory_space<vmem>>, %arg4: memref<5x12xf32, #tpu.memory_space<vmem>>, %arg5: memref<5x1xf32, #tpu.memory_space<vmem>>, %arg6: memref<1x5x288xf32, #tpu.memory_space<vmem>>) attributes {dimension_semantics = [#tpu.dimension_semantics<parallel>], iteration_bounds = array<i64: 2>, scalar_prefetch = 0 : i64, scratch_operands = 0 : i64, tpu.core_type = #tpu.core_type<tc>, window_params = [{transform_indices = @transform_0, window_bounds = array<i64: 1, 16, 384>}, {pipeline_mode = #tpu.pipeline_mode<synchronous>, transform_indices = @transform_1, window_bounds = array<i64: 12, 144>}, {pipeline_mode = #tpu.pipeline_mode<synchronous>, transform_indices = @transform_2, window_bounds = array<i64: 12, 1>}, {pipeline_mode = #tpu.pipeline_mode<synchronous>, transform_indices = @transform_3, window_bounds = array<i64: 5, 12>}, {pipeline_mode = #tpu.pipeline_mode<synchronous>, transform_indices = @transform_4, window_bounds = array<i64: 5, 1>}, {transform_indices = @transform_5, window_bounds = array<i64: 1, 5, 288>}]} {
    %c0 = arith.constant 0 : index
    %c0_0 = arith.constant 0 : index
    %c0_1 = arith.constant 0 : index
    %0 = vector.load %arg1[%c0, %c0_0, %c0_1] : memref<1x16x384xf32, #tpu.memory_space<vmem>>, vector<1x16x288xf32>
    %1 = vector.shape_cast %0 : vector<1x16x288xf32> to vector<16x288xf32>
    %c0_2 = arith.constant 0 : index
    %c0_3 = arith.constant 0 : index
    %c1 = arith.constant 1 : index
    %2 = vector.load %arg1[%c0_2, %c0_3, %c1] : memref<1x16x384xf32, #tpu.memory_space<vmem>>, vector<1x16x288xf32>
    %3 = vector.shape_cast %2 : vector<1x16x288xf32> to vector<16x288xf32>
    %c0_4 = arith.constant 0 : index
    %c0_5 = arith.constant 0 : index
    %c2 = arith.constant 2 : index
    %4 = vector.load %arg1[%c0_4, %c0_5, %c2] : memref<1x16x384xf32, #tpu.memory_space<vmem>>, vector<1x16x288xf32>
    %5 = vector.shape_cast %4 : vector<1x16x288xf32> to vector<16x288xf32>
    %c0_6 = arith.constant 0 : index
    %c0_7 = arith.constant 0 : index
    %c18 = arith.constant 18 : index
    %6 = vector.load %arg1[%c0_6, %c0_7, %c18] : memref<1x16x384xf32, #tpu.memory_space<vmem>>, vector<1x16x288xf32>
    %7 = vector.shape_cast %6 : vector<1x16x288xf32> to vector<16x288xf32>
    %c0_8 = arith.constant 0 : index
    %c0_9 = arith.constant 0 : index
    %c19 = arith.constant 19 : index
    %8 = vector.load %arg1[%c0_8, %c0_9, %c19] : memref<1x16x384xf32, #tpu.memory_space<vmem>>, vector<1x16x288xf32>
    %9 = vector.shape_cast %8 : vector<1x16x288xf32> to vector<16x288xf32>
    %c0_10 = arith.constant 0 : index
    %c0_11 = arith.constant 0 : index
    %c20 = arith.constant 20 : index
    %10 = vector.load %arg1[%c0_10, %c0_11, %c20] : memref<1x16x384xf32, #tpu.memory_space<vmem>>, vector<1x16x288xf32>
    %11 = vector.shape_cast %10 : vector<1x16x288xf32> to vector<16x288xf32>
    %c0_12 = arith.constant 0 : index
    %c0_13 = arith.constant 0 : index
    %c36 = arith.constant 36 : index
    %12 = vector.load %arg1[%c0_12, %c0_13, %c36] : memref<1x16x384xf32, #tpu.memory_space<vmem>>, vector<1x16x288xf32>
    %13 = vector.shape_cast %12 : vector<1x16x288xf32> to vector<16x288xf32>
    %c0_14 = arith.constant 0 : index
    %c0_15 = arith.constant 0 : index
    %c37 = arith.constant 37 : index
    %14 = vector.load %arg1[%c0_14, %c0_15, %c37] : memref<1x16x384xf32, #tpu.memory_space<vmem>>, vector<1x16x288xf32>
    %15 = vector.shape_cast %14 : vector<1x16x288xf32> to vector<16x288xf32>
    %c0_16 = arith.constant 0 : index
    %c0_17 = arith.constant 0 : index
    %c38 = arith.constant 38 : index
    %16 = vector.load %arg1[%c0_16, %c0_17, %c38] : memref<1x16x384xf32, #tpu.memory_space<vmem>>, vector<1x16x288xf32>
    %17 = vector.shape_cast %16 : vector<1x16x288xf32> to vector<16x288xf32>
    %18 = tpu.concatenate %1, %3, %5, %7, %9, %11, %13, %15, %17 in 0 : vector<16x288xf32>, vector<16x288xf32>, vector<16x288xf32>, vector<16x288xf32>, vector<16x288xf32>, vector<16x288xf32>, vector<16x288xf32>, vector<16x288xf32>, vector<16x288xf32> -> vector<144x288xf32>
    %c0_18 = arith.constant 0 : index
    %c0_19 = arith.constant 0 : index
    %19 = vector.load %arg2[%c0_18, %c0_19] : memref<12x144xf32, #tpu.memory_space<vmem>>, vector<12x144xf32>
    %cst = arith.constant dense<0.000000e+00> : vector<12x288xf32>
    %20 = tpu.matmul %19, %18, %cst {dimension_numbers = #tpu.dot_dimension_numbers<[1], [0], [0], [1], [0, 0, 1, 1], [], []>} : vector<12x144xf32>, vector<144x288xf32>, vector<12x288xf32> -> vector<12x288xf32>
    %c0_20 = arith.constant 0 : index
    %c0_21 = arith.constant 0 : index
    %21 = vector.load %arg3[%c0_20, %c0_21] : memref<12x1xf32, #tpu.memory_space<vmem>>, vector<12x1xf32>
    %22 = vector.broadcast %21 : vector<12x1xf32> to vector<12x288xf32>
    %23 = arith.addf %20, %22 : vector<12x288xf32>
    %cst_22 = arith.constant 0.000000e+00 : f32
    %24 = vector.broadcast %cst_22 : f32 to vector<12x288xf32>
    %25 = arith.maximumf %23, %24 : vector<12x288xf32>
    %c0_23 = arith.constant 0 : index
    %c0_24 = arith.constant 0 : index
    %26 = vector.load %arg4[%c0_23, %c0_24] : memref<5x12xf32, #tpu.memory_space<vmem>>, vector<5x12xf32>
    %cst_25 = arith.constant dense<0.000000e+00> : vector<5x288xf32>
    %27 = tpu.matmul %26, %25, %cst_25 {dimension_numbers = #tpu.dot_dimension_numbers<[1], [0], [0], [1], [0, 0, 1, 1], [], []>} : vector<5x12xf32>, vector<12x288xf32>, vector<5x288xf32> -> vector<5x288xf32>
    %c0_26 = arith.constant 0 : index
    %c0_27 = arith.constant 0 : index
    %28 = vector.load %arg5[%c0_26, %c0_27] : memref<5x1xf32, #tpu.memory_space<vmem>>, vector<5x1xf32>
    %29 = vector.broadcast %28 : vector<5x1xf32> to vector<5x288xf32>
    %30 = arith.addf %27, %29 : vector<5x288xf32>
    %c0_28 = arith.constant 0 : index
    %c0_29 = arith.constant 0 : index
    %c0_30 = arith.constant 0 : index
    %31 = vector.load %arg6[%c0_28, %c0_29, %c0_30] : memref<1x5x288xf32, #tpu.memory_space<vmem>>, vector<1x5x288xf32>
    %32 = vector.shape_cast %31 : vector<1x5x288xf32> to vector<5x288xf32>
    %33 = vector.shape_cast %30 : vector<5x288xf32> to vector<1x5x288xf32>
    tpu.vector_store %arg6[%c0_28, %c0_29, %c0_30], %33 {strides = array<i32>} : memref<1x5x288xf32, #tpu.memory_space<vmem>>, vector<1x5x288xf32>,
    return
  }
  func.func @transform_0(%arg0: i32) -> (i32, i32, i32) {
    %c0_i32 = arith.constant 0 : i32
    %c0_i32_0 = arith.constant 0 : i32
    %c0_i32_1 = arith.constant 0 : i32
    return %arg0, %c0_i32, %c0_i32_0 : i32, i32, i32
  }
  func.func @transform_1(%arg0: i32) -> (i32, i32) {
    %c0_i32 = arith.constant 0 : i32
    %c0_i32_0 = arith.constant 0 : i32
    %c0_i32_1 = arith.constant 0 : i32
    return %c0_i32, %c0_i32_0 : i32, i32
  }
  func.func @transform_2(%arg0: i32) -> (i32, i32) {
    %c0_i32 = arith.constant 0 : i32
    %c0_i32_0 = arith.constant 0 : i32
    %c0_i32_1 = arith.constant 0 : i32
    return %c0_i32, %c0_i32_0 : i32, i32
  }
  func.func @transform_3(%arg0: i32) -> (i32, i32) {
    %c0_i32 = arith.constant 0 : i32
    %c0_i32_0 = arith.constant 0 : i32
    %c0_i32_1 = arith.constant 0 : i32
    return %c0_i32, %c0_i32_0 : i32, i32
  }
  func.func @transform_4(%arg0: i32) -> (i32, i32) {
    %c0_i32 = arith.constant 0 : i32
    %c0_i32_0 = arith.constant 0 : i32
    %c0_i32_1 = arith.constant 0 : i32
    return %c0_i32, %c0_i32_0 : i32, i32
  }
  func.func @transform_5(%arg0: i32) -> (i32, i32, i32) {
    %c0_i32 = arith.constant 0 : i32
    %c0_i32_0 = arith.constant 0 : i32
    %c0_i32_1 = arith.constant 0 : i32
    return %arg0, %c0_i32, %c0_i32_0 : i32, i32, i32
  }
}

</mosaic_0001>

<llo_original>
// kernel: tpu_custom_call.1
$region0: #{tpu_custom_call.1}
  #allocation0 [shape = 'u32[]', space=smem, size = 0x4, offset = 0x4, fixed_abs, tag = 'smem constant byte address 0x4 - core index']
  #allocation1 [shape = 'u32[144,128]{1,0:T(1,128)}', space=vmem, size = 0x12000, scoped, tag = 'internal scratch']
  %s0 = inlined_call_operand.hbm [shape: f32[2,16,384], index: 0, kind: input, shape index: {}]
  %s1 = inlined_call_operand.hbm [shape: f32[12,144], index: 1, kind: input, shape index: {}]
  %s2 = inlined_call_operand.vmem [shape: f32[12,1], index: 2, kind: input, shape index: {}]
  %s3 = inlined_call_operand.vmem [shape: f32[5,12], index: 3, kind: input, shape index: {}]
  %s4 = inlined_call_operand.vmem [shape: f32[5,1], index: 4, kind: input, shape index: {}]
  %s5 = inlined_call_operand.vmem [shape: f32[2,5,288], index: 5, kind: output, shape index: {}]
  %s6 = sld [smem:[#allocation0]]
  $region61: #{tpu_custom_call.1} parent=0
    _
  %s8 = ssub.s32 1, %s6
  %s9 = scalar_select 0, %s8, %s6
  $region1: #{tpu_custom_call.1} parent=0
    #allocation2 [shape = 'u8[49152]{0}', space=vmem, size = 0xc000, scoped, tag = 'input window, operand 0']
    #allocation3 [shape = 's32[2]{0}', space=sflag, size = 0x8, scoped, tag = 'scoped memory for tpu_custom_call.1']
    #allocation4 [shape = 'u8[16384]{0}', space=vmem, size = 0x4000, scoped, tag = 'input window, operand 1, single buffered']
    #allocation5 [shape = 's32[1]{0}', space=sflag, size = 0x4, scoped, tag = 'scoped memory for tpu_custom_call.1']
    %10 = vsyncpa [#allocation3], 0
    %s11 = scalar_lea.sflag [#allocation3], 1
    %12 = vsyncpa %s11, 0
    %13 = vsyncpa [#allocation5], 0
    loop: start=0, step=1, limit=4
    $region2: #{tpu_custom_call.1} parent=1 // loop_pre_header
      _
    $region3: #{tpu_custom_call.1} parent=1 // loop_header
      %s15 = sphi 0, %s19
      %p16 = scmp.ge.s32.totalorder %s15, 4
      %s25 = sphi 0, %s27
      %s28 = sphi 0, %s25
      %s29 = sphi 0, %s28
      %s45 = sphi 0, %s29
      %s49 = sphi 0, %s49
      %s51 = sphi 0, %s49
      %s52 = sphi 0, %s51
      %s66 = sphi 0, %s52
      %s70 = sphi 0, %s70
      %s72 = sphi 0, %s70
      %s73 = sphi 0, %s72
      %s87 = sphi 0, %s73
      %s91 = sphi 0, %s91
      %s93 = sphi 0, %s91
      %s94 = sphi 0, %s93
      %s108 = sphi 0, %s94
      %s112 = sphi 0, %s112
      %s114 = sphi 0, %s112
      %s115 = sphi 0, %s114
      %s129 = sphi 0, %s115
      %s135 = sphi 0, %s137
      %s138 = sphi 0, %s135
      %s139 = sphi 0, %s138
      %s155 = sphi 0, %s139
    $region4: #{tpu_custom_call.1} parent=1 // loop_header_branch
      %18 = sbr.rel (%p16) target = $region8
    $region5: #{tpu_custom_call.1} parent=1 // loop_body
      %s20 = ssub.s32 %s15, 1
      %s21 = ssub.s32 %s15, 2
      %s22 = sadd.s32 %s15, 1
      %s23 = ssub.s32 %s15, %s22
      %p24 = scmp.eq.s32.totalorder %s23, 0
      %s26 = sadd.s32 %s25, 1
      %s27 = scalar_select %p24, %s25, %s26
      %p30 = pneg %p24
      %p31 = scmp.eq.s32.totalorder %s15, 1
      %p32 = por %p30, %p31
      %p33 = scmp.ne.s32.totalorder %s25, %s28
      %p34 = scmp.eq.s32.totalorder %s15, 0
      %p35 = por %p33, %p34
      %p36 = scmp.ne.s32.totalorder %s25, %s28
      %p37 = scmp.eq.s32.totalorder %s20, 1
      %p38 = por %p36, %p37
      %p39 = scmp.ne.s32.totalorder %s28, %s29
      %p40 = scmp.eq.s32.totalorder %s20, 0
      %p41 = por %p39, %p40
      %p42 = scmp.ne.s32.totalorder %s28, %s29
      %p43 = scmp.eq.s32.totalorder %s21, 1
      %p44 = por %p42, %p43
      %p46 = scmp.ne.s32.totalorder %s29, %s45
      %p47 = scmp.eq.s32.totalorder %s21, 0
      %p48 = por %p46, %p47
      %s50 = sadd.s32 %s49, 1
      %p53 = scmp.eq.s32.totalorder %s15, 1
      %p54 = scmp.ne.s32.totalorder %s49, %s51
      %p55 = scmp.eq.s32.totalorder %s15, 0
      %p56 = por %p54, %p55
      %p57 = scmp.ne.s32.totalorder %s49, %s51
      %p58 = scmp.eq.s32.totalorder %s20, 1
      %p59 = por %p57, %p58
      %p60 = scmp.ne.s32.totalorder %s51, %s52
      %p61 = scmp.eq.s32.totalorder %s20, 0
      %p62 = por %p60, %p61
      %p63 = scmp.ne.s32.totalorder %s51, %s52
      %p64 = scmp.eq.s32.totalorder %s21, 1
      %p65 = por %p63, %p64
      %p67 = scmp.ne.s32.totalorder %s52, %s66
      %p68 = scmp.eq.s32.totalorder %s21, 0
      %p69 = por %p67, %p68
      %s71 = sadd.s32 %s70, 1
      %p74 = scmp.eq.s32.totalorder %s15, 1
      %p75 = scmp.ne.s32.totalorder %s70, %s72
      %p76 = scmp.eq.s32.totalorder %s15, 0
      %p77 = por %p75, %p76
      %p78 = scmp.ne.s32.totalorder %s70, %s72
      %p79 = scmp.eq.s32.totalorder %s20, 1
      %p80 = por %p78, %p79
      %p81 = scmp.ne.s32.totalorder %s72, %s73
      %p82 = scmp.eq.s32.totalorder %s20, 0
      %p83 = por %p81, %p82
      %p84 = scmp.ne.s32.totalorder %s72, %s73
      %p85 = scmp.eq.s32.totalorder %s21, 1
      %p86 = por %p84, %p85
      %p88 = scmp.ne.s32.totalorder %s73, %s87
      %p89 = scmp.eq.s32.totalorder %s21, 0
      %p90 = por %p88, %p89
      %s92 = sadd.s32 %s91, 1
      %p95 = scmp.eq.s32.totalorder %s15, 1
      %p96 = scmp.ne.s32.totalorder %s91, %s93
      %p97 = scmp.eq.s32.totalorder %s15, 0
      %p98 = por %p96, %p97
      %p99 = scmp.ne.s32.totalorder %s91, %s93
      %p100 = scmp.eq.s32.totalorder %s20, 1
      %p101 = por %p99, %p100
      %p102 = scmp.ne.s32.totalorder %s93, %s94
      %p103 = scmp.eq.s32.totalorder %s20, 0
      %p104 = por %p102, %p103
      %p105 = scmp.ne.s32.totalorder %s93, %s94
      %p106 = scmp.eq.s32.totalorder %s21, 1
      %p107 = por %p105, %p106
      %p109 = scmp.ne.s32.totalorder %s94, %s108
      %p110 = scmp.eq.s32.totalorder %s21, 0
      %p111 = por %p109, %p110
      %s113 = sadd.s32 %s112, 1
      %p116 = scmp.eq.s32.totalorder %s15, 1
      %p117 = scmp.ne.s32.totalorder %s112, %s114
      %p118 = scmp.eq.s32.totalorder %s15, 0
      %p119 = por %p117, %p118
      %p120 = scmp.ne.s32.totalorder %s112, %s114
      %p121 = scmp.eq.s32.totalorder %s20, 1
      %p122 = por %p120, %p121
      %p123 = scmp.ne.s32.totalorder %s114, %s115
      %p124 = scmp.eq.s32.totalorder %s20, 0
      %p125 = por %p123, %p124
      %p126 = scmp.ne.s32.totalorder %s114, %s115
      %p127 = scmp.eq.s32.totalorder %s21, 1
      %p128 = por %p126, %p127
      %p130 = scmp.ne.s32.totalorder %s115, %s129
      %p131 = scmp.eq.s32.totalorder %s21, 0
      %p132 = por %p130, %p131
      %s133 = ssub.s32 %s15, %s22
      %p134 = scmp.eq.s32.totalorder %s133, 0
      %s136 = sadd.s32 %s135, 1
      %s137 = scalar_select %p134, %s135, %s136
      %p140 = pneg %p134
      %p141 = scmp.eq.s32.totalorder %s15, 1
      %p142 = por %p140, %p141
      %p143 = scmp.ne.s32.totalorder %s135, %s138
      %p144 = scmp.eq.s32.totalorder %s15, 0
      %p145 = por %p143, %p144
      %p146 = scmp.ne.s32.totalorder %s135, %s138
      %p147 = scmp.eq.s32.totalorder %s20, 1
      %p148 = por %p146, %p147
      %p149 = scmp.ne.s32.totalorder %s138, %s139
      %p150 = scmp.eq.s32.totalorder %s20, 0
      %p151 = por %p149, %p150
      %p152 = scmp.ne.s32.totalorder %s138, %s139
      %p153 = scmp.eq.s32.totalorder %s21, 1
      %p154 = por %p152, %p153
      %p156 = scmp.ne.s32.totalorder %s139, %s155
      %p157 = scmp.eq.s32.totalorder %s21, 0
      %p158 = por %p156, %p157
      %p159 = scmp.le.s32.totalorder 1, %s15
      %p160 = scmp.lt.s32.totalorder %s15, 3
      %p161 = pnand %p159, %p160
      %p162 = pneg %p161
      // Predicated region
      $region9: #{tpu_custom_call.1} parent=5 // pred_check
        _
      $region10: #{tpu_custom_call.1} parent=5 // pred_check_branch
        %164 = sbr.rel (%p161) target = $region12
      $region11: #{tpu_custom_call.1} parent=5 // pred_region
        %s165 = ssub.s32 %s15, 1
        // Predicated region
        $region13: #{tpu_custom_call.1} parent=11 // pred_check
          %p166 = pneg %p62
        $region14: #{tpu_custom_call.1} parent=11 // pred_check_branch
          %168 = sbr.rel (%p166) target = $region16
        $region15: #{tpu_custom_call.1} parent=11 // pred_region
          %s170 = ssub.s32 512, 512
          %171 = vsyncadd [#allocation5], %s170
          %s172 = sshll.u32 [#allocation4], 4
          %s173 = int_to_ptr.vmem [resolvable:$true] %s172
          %178 = dma.hbm_to_vmem [thread:$0]  %s1, 512, %s173, [#allocation5], 256, 256, 16
        $region16: #{tpu_custom_call.1} parent=11 // pred_fallthru
          _
        // Predicated region
        $region17: #{tpu_custom_call.1} parent=11 // pred_check
          %p179 = pneg %p83
        $region18: #{tpu_custom_call.1} parent=11 // pred_check_branch
          %181 = sbr.rel (%p179) target = $region20
        $region19: #{tpu_custom_call.1} parent=11 // pred_region
          _
        $region20: #{tpu_custom_call.1} parent=11 // pred_fallthru
          _
        // Predicated region
        $region21: #{tpu_custom_call.1} parent=11 // pred_check
          %p182 = pneg %p104
        $region22: #{tpu_custom_call.1} parent=11 // pred_check_branch
          %184 = sbr.rel (%p182) target = $region24
        $region23: #{tpu_custom_call.1} parent=11 // pred_region
          _
        $region24: #{tpu_custom_call.1} parent=11 // pred_fallthru
          _
        // Predicated region
        $region25: #{tpu_custom_call.1} parent=11 // pred_check
          %p185 = pneg %p125
        $region26: #{tpu_custom_call.1} parent=11 // pred_check_branch
          %187 = sbr.rel (%p185) target = $region28
        $region27: #{tpu_custom_call.1} parent=11 // pred_region
          _
        $region28: #{tpu_custom_call.1} parent=11 // pred_fallthru
          _
      $region12: #{tpu_custom_call.1} parent=5 // pred_fallthru
        _
      %p188 = scmp.lt.s32.totalorder %s15, 2
      // Predicated region
      $region29: #{tpu_custom_call.1} parent=5 // pred_check
        %p189 = pneg %p188
      $region30: #{tpu_custom_call.1} parent=5 // pred_check_branch
        %191 = sbr.rel (%p189) target = $region32
      $region31: #{tpu_custom_call.1} parent=5 // pred_region
        // Predicated region
        $region33: #{tpu_custom_call.1} parent=31 // pred_check
          %p192 = pneg %p35
        $region34: #{tpu_custom_call.1} parent=31 // pred_check_branch
          %194 = sbr.rel (%p192) target = $region36
        $region35: #{tpu_custom_call.1} parent=31 // pred_region
          %s195 = sand.u32 %s25, 1
          %s196 = scalar_lea.sflag [#allocation3], %s195
          %s197 = sand.u32 %s25, 1
          %s198 = smul.addr %s197, 48
          %s199 = scalar_lea.vmem [#allocation2], %s198
          %s201 = ssub.s32 768, 768
          %202 = vsyncadd %s196, %s201
          %s203 = smul.addr %s15, 6
          %s204 = smul.addr %s203, 128
          %s205 = scalar_lea.hbm %s0, %s204
          %s206 = sshll.u32 %s199, 4
          %s207 = int_to_ptr.vmem [resolvable:$true] %s206
          %212 = dma.hbm_to_vmem [thread:$0]  %s205, 768, %s207, %s196, 384, 384, 24
        $region36: #{tpu_custom_call.1} parent=31 // pred_fallthru
          _
      $region32: #{tpu_custom_call.1} parent=5 // pred_fallthru
        _
      %p213 = scmp.le.s32.totalorder 1, %s15
      %p214 = scmp.lt.s32.totalorder %s15, 3
      %p215 = pnand %p213, %p214
      %p216 = pneg %p215
      // Predicated region
      $region37: #{tpu_custom_call.1} parent=5 // pred_check
        _
      $region38: #{tpu_custom_call.1} parent=5 // pred_check_branch
        %218 = sbr.rel (%p215) target = $region40
      $region39: #{tpu_custom_call.1} parent=5 // pred_region
        %s219 = ssub.s32 %s15, 1
        %s220 = sand.u32 %s28, 1
        %s221 = scalar_lea.sflag [#allocation3], %s220
        %s222 = sand.u32 %s28, 1
        %s223 = smul.addr %s222, 48
        %s224 = scalar_lea.vmem [#allocation2], %s223
        // Predicated region
        $region41: #{tpu_custom_call.1} parent=39 // pred_check
          %p225 = pneg %p41
        $region42: #{tpu_custom_call.1} parent=39 // pred_check_branch
          %227 = sbr.rel (%p225) target = $region44
        $region43: #{tpu_custom_call.1} parent=39 // pred_region
          %228 = dma.done %s221, 768
        $region44: #{tpu_custom_call.1} parent=39 // pred_fallthru
          _
        // Predicated region
        $region45: #{tpu_custom_call.1} parent=39 // pred_check
          %p229 = pneg %p62
        $region46: #{tpu_custom_call.1} parent=39 // pred_check_branch
          %231 = sbr.rel (%p229) target = $region48
        $region47: #{tpu_custom_call.1} parent=39 // pred_region
          %232 = dma.done [#allocation5], 512
        $region48: #{tpu_custom_call.1} parent=39 // pred_fallthru
          _
        %s233 = sand.u32 %s28, 1
        %s234 = scalar_lea.sflag [#allocation3], %s233
        %s235 = sand.u32 %s28, 1
        %s236 = smul.addr %s235, 48
        %s237 = scalar_lea.vmem [#allocation2], %s236
        %p238 = pneg %p41
        %p239 = pneg %p38
        %p240 = pneg %p62
        %p241 = pneg %p59
        %p242 = pneg %p83
        %p243 = pneg %p80
        %p244 = pneg %p104
        %p245 = pneg %p101
        %p246 = pneg %p125
        %p247 = pneg %p122
        %p248 = pneg %p151
        %p249 = pneg %p148
        %p250 = scmp.lt.s32.totalorder %s20, 1
        %s251 = scalar_select %p250, %s20, 1
        %s252 = smul.addr %s251, 3
        %s253 = smul.addr %s252, 8
        %s254 = scalar_lea.vmem %s5, %s253
        %p255 = scmp.lt.s32.totalorder %s20, 1
        %s256 = scalar_select %p255, %s20, 1
        %s257 = smul.addr %s256, 3
        %s258 = smul.addr %s257, 8
        %s259 = scalar_lea.vmem %s5, %s258
        %v260 = vld [vmem:[%s224] sm:$0xff]
        %v261 = vld [vmem:[%s224 + $0x8] sm:$0xff]
        %v262 = vld [vmem:[%s224 + $0x10] sm:$0xff]
        %v263 = vld [vmem:[%s224 + $0x18] sm:$0xff]
        %v264 = vld [vmem:[%s224 + $0x20] sm:$0xff]
        %v265 = vld [vmem:[%s224 + $0x28] sm:$0xff]
        %272 = vrot.lane.b32.xlu0 %v260, 127
        %v273 = vpop.permute.xlu0 %272
        %274 = vrot.lane.b32.xlu0 %v261, 127
        %v275 = vpop.permute.xlu0 %274
        %276 = vrot.lane.b32.xlu0 %v262, 127
        %v277 = vpop.permute.xlu0 %276
        %278 = vrot.lane.b32.xlu0 %v263, 127
        %v279 = vpop.permute.xlu0 %278
        %280 = vrot.lane.b32.xlu0 %v264, 127
        %v281 = vpop.permute.xlu0 %280
        %282 = vrot.lane.b32.xlu0 %v265, 127
        %v283 = vpop.permute.xlu0 %282
        %vm284 = vcmask 1039360
        %v285 = vsel %vm284, %v273, %v275
        %v286 = vsel %vm284, %v275, %v277
        %v287 = vsel %vm284, %v279, %v281
        %v288 = vsel %vm284, %v281, %v283
        %295 = vrot.lane.b32.xlu0 %v260, 126
        %v296 = vpop.permute.xlu0 %295
        %297 = vrot.lane.b32.xlu0 %v261, 126
        %v298 = vpop.permute.xlu0 %297
        %299 = vrot.lane.b32.xlu0 %v262, 126
        %v300 = vpop.permute.xlu0 %299
        %301 = vrot.lane.b32.xlu0 %v263, 126
        %v302 = vpop.permute.xlu0 %301
        %303 = vrot.lane.b32.xlu0 %v264, 126
        %v304 = vpop.permute.xlu0 %303
        %305 = vrot.lane.b32.xlu0 %v265, 126
        %v306 = vpop.permute.xlu0 %305
        %vm307 = vcmask 1031168
        %v308 = vsel %vm307, %v296, %v298
        %v309 = vsel %vm307, %v298, %v300
        %v310 = vsel %vm307, %v302, %v304
        %v311 = vsel %vm307, %v304, %v306
        %318 = vrot.lane.b32.xlu0 %v260, 110
        %v319 = vpop.permute.xlu0 %318
        %320 = vrot.lane.b32.xlu0 %v261, 110
        %v321 = vpop.permute.xlu0 %320
        %322 = vrot.lane.b32.xlu0 %v262, 110
        %v323 = vpop.permute.xlu0 %322
        %324 = vrot.lane.b32.xlu0 %v263, 110
        %v325 = vpop.permute.xlu0 %324
        %326 = vrot.lane.b32.xlu0 %v264, 110
        %v327 = vpop.permute.xlu0 %326
        %328 = vrot.lane.b32.xlu0 %v265, 110
        %v329 = vpop.permute.xlu0 %328
        %vm330 = vcmask 900096
        %v331 = vsel %vm330, %v319, %v321
        %v332 = vsel %vm330, %v321, %v323
        %v333 = vsel %vm330, %v325, %v327
        %v334 = vsel %vm330, %v327, %v329
        %341 = vrot.lane.b32.xlu0 %v260, 109
        %v342 = vpop.permute.xlu0 %341
        %343 = vrot.lane.b32.xlu0 %v261, 109
        %v344 = vpop.permute.xlu0 %343
        %345 = vrot.lane.b32.xlu0 %v262, 109
        %v346 = vpop.permute.xlu0 %345
        %347 = vrot.lane.b32.xlu0 %v263, 109
        %v348 = vpop.permute.xlu0 %347
        %349 = vrot.lane.b32.xlu0 %v264, 109
        %v350 = vpop.permute.xlu0 %349
        %351 = vrot.lane.b32.xlu0 %v265, 109
        %v352 = vpop.permute.xlu0 %351
        %vm353 = vcmask 891904
        %v354 = vsel %vm353, %v342, %v344
        %v355 = vsel %vm353, %v344, %v346
        %v356 = vsel %vm353, %v348, %v350
        %v357 = vsel %vm353, %v350, %v352
        %364 = vrot.lane.b32.xlu0 %v260, 108
        %v365 = vpop.permute.xlu0 %364
        %366 = vrot.lane.b32.xlu0 %v261, 108
        %v367 = vpop.permute.xlu0 %366
        %368 = vrot.lane.b32.xlu0 %v262, 108
        %v369 = vpop.permute.xlu0 %368
        %370 = vrot.lane.b32.xlu0 %v263, 108
        %v371 = vpop.permute.xlu0 %370
        %372 = vrot.lane.b32.xlu0 %v264, 108
        %v373 = vpop.permute.xlu0 %372
        %374 = vrot.lane.b32.xlu0 %v265, 108
        %v375 = vpop.permute.xlu0 %374
        %vm376 = vcmask 883712
        %v377 = vsel %vm376, %v365, %v367
        %v378 = vsel %vm376, %v367, %v369
        %v379 = vsel %vm376, %v371, %v373
        %v380 = vsel %vm376, %v373, %v375
        %387 = vrot.lane.b32.xlu0 %v260, 92
        %v388 = vpop.permute.xlu0 %387
        %389 = vrot.lane.b32.xlu0 %v261, 92
        %v390 = vpop.permute.xlu0 %389
        %391 = vrot.lane.b32.xlu0 %v262, 92
        %v392 = vpop.permute.xlu0 %391
        %393 = vrot.lane.b32.xlu0 %v263, 92
        %v394 = vpop.permute.xlu0 %393
        %395 = vrot.lane.b32.xlu0 %v264, 92
        %v396 = vpop.permute.xlu0 %395
        %397 = vrot.lane.b32.xlu0 %v265, 92
        %v398 = vpop.permute.xlu0 %397
        %vm399 = vcmask 752640
        %v400 = vsel %vm399, %v388, %v390
        %v401 = vsel %vm399, %v390, %v392
        %v402 = vsel %vm399, %v394, %v396
        %v403 = vsel %vm399, %v396, %v398
        %410 = vrot.lane.b32.xlu0 %v260, 91
        %v411 = vpop.permute.xlu0 %410
        %412 = vrot.lane.b32.xlu0 %v261, 91
        %v413 = vpop.permute.xlu0 %412
        %414 = vrot.lane.b32.xlu0 %v262, 91
        %v415 = vpop.permute.xlu0 %414
        %416 = vrot.lane.b32.xlu0 %v263, 91
        %v417 = vpop.permute.xlu0 %416
        %418 = vrot.lane.b32.xlu0 %v264, 91
        %v419 = vpop.permute.xlu0 %418
        %420 = vrot.lane.b32.xlu0 %v265, 91
        %v421 = vpop.permute.xlu0 %420
        %vm422 = vcmask 744448
        %v423 = vsel %vm422, %v411, %v413
        %v424 = vsel %vm422, %v413, %v415
        %v425 = vsel %vm422, %v417, %v419
        %v426 = vsel %vm422, %v419, %v421
        %433 = vrot.lane.b32.xlu0 %v260, 90
        %v434 = vpop.permute.xlu0 %433
        %435 = vrot.lane.b32.xlu0 %v261, 90
        %v436 = vpop.permute.xlu0 %435
        %437 = vrot.lane.b32.xlu0 %v262, 90
        %v438 = vpop.permute.xlu0 %437
        %439 = vrot.lane.b32.xlu0 %v263, 90
        %v440 = vpop.permute.xlu0 %439
        %441 = vrot.lane.b32.xlu0 %v264, 90
        %v442 = vpop.permute.xlu0 %441
        %443 = vrot.lane.b32.xlu0 %v265, 90
        %v444 = vpop.permute.xlu0 %443
        %vm445 = vcmask 736256
        %v446 = vsel %vm445, %v434, %v436
        %v447 = vsel %vm445, %v436, %v438
        %v448 = vsel %vm445, %v440, %v442
        %v449 = vsel %vm445, %v442, %v444
        %v456 = vld [vmem:[#allocation4] sm:$0xff]
        %v457 = vld [vmem:[#allocation4 + $0x8] sm:$0xff]
        %v458 = vld [vmem:[#allocation4 + $0x10] sm:$0xf]
        %v459 = vld [vmem:[#allocation4 + $0x18] sm:$0xf]
        %v460 = vld [vmem:[%s2] sm:$0xff]
        %v461 = vld [vmem:[%s2 + $0x8] sm:$0xf]
        %463 = vset.pattern.permute.xlu0 0
        %464 = vperm.xlu0 %463, %v460
        %v465 = vpop.permute.xlu0 %464
        %468 = vset.pattern.permute.xlu0 0
        %469 = vperm.xlu0 %468, %v461
        %v470 = vpop.permute.xlu0 %469
        %vm472 = vcmask 130048
        %v474 = vsel %vm472, %v457, 0
        %v477 = vsel %vm472, %v459, 0
        %479 = vmatprep.subr.mxu0 %v426
        %480 = vmatpush1.msra.mxu0 %v425
        %481 = vmatprep.subr.mxu0 %v424
        %482 = vmatpush1.msra.mxu0 %v423
        %483 = vmatprep.subr.mxu0 %v403
        %484 = vmatpush1.msra.mxu0 %v402
        %485 = vmatprep.subr.mxu0 %v401
        %486 = vmatpush1.msra.mxu0 %v400
        %487 = vmatprep.subr.mxu0 %v380
        %488 = vmatpush1.msra.mxu0 %v379
        %489 = vmatprep.subr.mxu0 %v378
        %490 = vmatpush1.msra.mxu0 %v377
        %491 = vmatprep.subr.mxu0 %v357
        %492 = vmatpush1.msra.mxu0 %v356
        %493 = vmatprep.subr.mxu0 %v355
        %494 = vmatpush1.msra.mxu0 %v354
        %495 = vmatprep.subr.mxu0 %v334
        %496 = vmatpush1.msra.mxu0 %v333
        %497 = vmatprep.subr.mxu0 %v332
        %498 = vmatpush1.msra.mxu0 %v331
        %499 = vmatprep.subr.mxu0 %v311
        %500 = vmatpush1.msra.mxu0 %v310
        %501 = vmatprep.subr.mxu0 %v309
        %502 = vmatpush1.msra.mxu0 %v308
        %503 = vmatprep.subr.mxu0 %v288
        %504 = vmatpush1.msra.mxu0 %v287
        %505 = vmatprep.subr.mxu0 %v286
        %506 = vmatpush1.msra.mxu0 %v285
        %507 = vmatprep.subr.mxu0 %v264
        %508 = vmatpush1.msra.mxu0 %v263
        %509 = vmatprep.subr.mxu0 %v261
        %510 = vmatpush1.msra.mxu0 %v260
        %511 = vmatprep.subr.mxu0 0.0
        %512 = vmatpush2.msra.mxu0 0.0
        %513 = vmatprep.subr.mxu0 0.0
        %514 = vmatpush2.msra.mxu0 0.0
        %515 = vmatprep.subr.mxu0 0.0
        %516 = vmatpush2.msra.mxu0 0.0
        %517 = vmatprep.subr.mxu0 0.0
        %518 = vmatpush2.msra.mxu0 0.0
        %519 = vmatprep.subr.mxu0 0.0
        %520 = vmatpush2.msra.mxu0 0.0
        %521 = vmatprep.subr.mxu0 0.0
        %522 = vmatpush2.msra.mxu0 0.0
        %523 = vmatprep.subr.mxu0 0.0
        %524 = vmatpush2.msra.mxu0 0.0
        %525 = vmatprep.subr.mxu0 0.0
        %526 = vmatpush2.msra.mxu0 0.0
        %527 = vmatprep.subr.mxu0 0.0
        %528 = vmatpush2.msra.mxu0 0.0
        %529 = vmatprep.subr.mxu0 0.0
        %530 = vmatpush2.msra.mxu0 0.0
        %531 = vmatprep.subr.mxu0 0.0
        %532 = vmatpush2.msra.mxu0 0.0
        %533 = vmatprep.subr.mxu0 0.0
        %534 = vmatpush2.msra.mxu0 0.0
        %535 = vmatprep.subr.mxu0 0.0
        %536 = vmatpush2.msra.mxu0 0.0
        %537 = vmatprep.subr.mxu0 0.0
        %538 = vmatpush2.msra.mxu0 0.0
        %539 = vmatprep.subr.mxu0 %v449
        %540 = vmatpush2.msra.mxu0 %v448
        %541 = vmatprep.subr.mxu0 %v447
        %542 = vmatpush2.msra.mxu0 %v446
        %543 = vmatprep.mubr.f32.mxu0 %v474
        %544 = vmatmul.mubr.f32.gmra.mxu0 %v456
        %v545 = vpop.f32.mrf.mxu0
        %v546 = vadd.f32 %v465, %v545
        %v547 = vpop.f32.mrf.mxu0
        %v548 = vadd.f32 %v465, %v547
        %549 = vmatprep.mubr.f32.mxu0 %v477
        %550 = vmatmul.mubr.f32.gmra.mxu0 %v458
        %v551 = vpop.f32.mrf.mxu0
        %v552 = vadd.f32 %v470, %v551
        %v553 = vpop.f32.mrf.mxu0
        %v554 = vadd.f32 %v470, %v553
        %555 = vdwg.mxu0
        %556 = vmatprep.subr.mxu0 0.0
        %557 = vmatpush1.msra.mxu0 %v421
        %558 = vmatprep.subr.mxu0 0.0
        %559 = vmatpush1.msra.mxu0 %v415
        %560 = vmatprep.subr.mxu0 0.0
        %561 = vmatpush1.msra.mxu0 %v398
        %562 = vmatprep.subr.mxu0 0.0
        %563 = vmatpush1.msra.mxu0 %v392
        %564 = vmatprep.subr.mxu0 0.0
        %565 = vmatpush1.msra.mxu0 %v375
        %566 = vmatprep.subr.mxu0 0.0
        %567 = vmatpush1.msra.mxu0 %v369
        %568 = vmatprep.subr.mxu0 0.0
        %569 = vmatpush1.msra.mxu0 %v352
        %570 = vmatprep.subr.mxu0 0.0
        %571 = vmatpush1.msra.mxu0 %v346
        %572 = vmatprep.subr.mxu0 0.0
        %573 = vmatpush1.msra.mxu0 %v329
        %574 = vmatprep.subr.mxu0 0.0
        %575 = vmatpush1.msra.mxu0 %v323
        %576 = vmatprep.subr.mxu0 0.0
        %577 = vmatpush1.msra.mxu0 %v306
        %578 = vmatprep.subr.mxu0 0.0
        %579 = vmatpush1.msra.mxu0 %v300
        %580 = vmatprep.subr.mxu0 0.0
        %581 = vmatpush1.msra.mxu0 %v283
        %582 = vmatprep.subr.mxu0 0.0
        %583 = vmatpush1.msra.mxu0 %v277
        %584 = vmatprep.subr.mxu0 0.0
        %585 = vmatpush1.msra.mxu0 %v265
        %586 = vmatprep.subr.mxu0 0.0
        %587 = vmatpush1.msra.mxu0 %v262
        %588 = vmatprep.subr.mxu0 0.0
        %589 = vmatpush2.msra.mxu0 0.0
        %590 = vmatprep.subr.mxu0 0.0
        %591 = vmatpush2.msra.mxu0 0.0
        %592 = vmatprep.subr.mxu0 0.0
        %593 = vmatpush2.msra.mxu0 0.0
        %594 = vmatprep.subr.mxu0 0.0
        %595 = vmatpush2.msra.mxu0 0.0
        %596 = vmatprep.subr.mxu0 0.0
        %597 = vmatpush2.msra.mxu0 0.0
        %598 = vmatprep.subr.mxu0 0.0
        %599 = vmatpush2.msra.mxu0 0.0
        %600 = vmatprep.subr.mxu0 0.0
        %601 = vmatpush2.msra.mxu0 0.0
        %602 = vmatprep.subr.mxu0 0.0
        %603 = vmatpush2.msra.mxu0 0.0
        %604 = vmatprep.subr.mxu0 0.0
        %605 = vmatpush2.msra.mxu0 0.0
        %606 = vmatprep.subr.mxu0 0.0
        %607 = vmatpush2.msra.mxu0 0.0
        %608 = vmatprep.subr.mxu0 0.0
        %609 = vmatpush2.msra.mxu0 0.0
        %610 = vmatprep.subr.mxu0 0.0
        %611 = vmatpush2.msra.mxu0 0.0
        %612 = vmatprep.subr.mxu0 0.0
        %613 = vmatpush2.msra.mxu0 0.0
        %614 = vmatprep.subr.mxu0 0.0
        %615 = vmatpush2.msra.mxu0 0.0
        %616 = vmatprep.subr.mxu0 0.0
        %617 = vmatpush2.msra.mxu0 %v444
        %618 = vmatprep.subr.mxu0 0.0
        %619 = vmatpush2.msra.mxu0 %v438
        %620 = vmatprep.mubr.f32.mxu0 %v474
        %621 = vmatmul.mubr.f32.gmra.mxu0 %v456
        %v622 = vpop.f32.mrf.mxu0
        %v623 = vadd.f32 %v465, %v622
        %v624 = vpop.f32.mrf.mxu0
        %625 = vmatprep.mubr.f32.mxu0 %v477
        %626 = vmatmul.mubr.f32.gmra.mxu0 %v458
        %v627 = vpop.f32.mrf.mxu0
        %v628 = vadd.f32 %v470, %v627
        %v629 = vpop.f32.mrf.mxu0
        %630 = vdwg.mxu0
        %v631 = vmax.f32 %v546, 0.0
        %v632 = vmax.f32 %v548, 0.0
        %v633 = vmax.f32 %v623, 0.0
        %v634 = vmax.f32 %v552, 0.0
        %v635 = vmax.f32 %v554, 0.0
        %v636 = vmax.f32 %v628, 0.0
        %v637 = vld [vmem:[%s3] sm:$0x1f]
        %v638 = vld [vmem:[%s4] sm:$0x1f]
        %640 = vset.pattern.permute.xlu0 0
        %641 = vperm.xlu0 %640, %v638
        %v642 = vpop.permute.xlu0 %641
        %vm644 = vcmask 97280
        %v646 = vsel %vm644, %v637, 0
        %vm648 = vcmask 1043456
        %v650 = vsel %vm648, %v634, 0
        %v653 = vsel %vm648, %v635, 0
        %v656 = vsel %vm648, %v636, 0
        %658 = vmatprep.subr.mxu0 0.0
        %659 = vmatpush1.msra.mxu0 0.0
        %660 = vmatprep.subr.mxu0 0.0
        %661 = vmatpush1.msra.mxu0 0.0
        %662 = vmatprep.subr.mxu0 0.0
        %663 = vmatpush1.msra.mxu0 0.0
        %664 = vmatprep.subr.mxu0 0.0
        %665 = vmatpush1.msra.mxu0 0.0
        %666 = vmatprep.subr.mxu0 0.0
        %667 = vmatpush1.msra.mxu0 0.0
        %668 = vmatprep.subr.mxu0 0.0
        %669 = vmatpush1.msra.mxu0 0.0
        %670 = vmatprep.subr.mxu0 0.0
        %671 = vmatpush1.msra.mxu0 0.0
        %672 = vmatprep.subr.mxu0 0.0
        %673 = vmatpush1.msra.mxu0 0.0
        %674 = vmatprep.subr.mxu0 0.0
        %675 = vmatpush1.msra.mxu0 0.0
        %676 = vmatprep.subr.mxu0 0.0
        %677 = vmatpush1.msra.mxu0 0.0
        %678 = vmatprep.subr.mxu0 0.0
        %679 = vmatpush1.msra.mxu0 0.0
        %680 = vmatprep.subr.mxu0 0.0
        %681 = vmatpush1.msra.mxu0 0.0
        %682 = vmatprep.subr.mxu0 0.0
        %683 = vmatpush1.msra.mxu0 0.0
        %684 = vmatprep.subr.mxu0 0.0
        %685 = vmatpush1.msra.mxu0 0.0
        %686 = vmatprep.subr.mxu0 %v653
        %687 = vmatpush1.msra.mxu0 %v650
        %688 = vmatprep.subr.mxu0 %v632
        %689 = vmatpush1.msra.mxu0 %v631
        %690 = vmatprep.subr.mxu0 0.0
        %691 = vmatpush2.msra.mxu0 0.0
        %692 = vmatprep.subr.mxu0 0.0
        %693 = vmatpush2.msra.mxu0 0.0
        %694 = vmatprep.subr.mxu0 0.0
        %695 = vmatpush2.msra.mxu0 0.0
        %696 = vmatprep.subr.mxu0 0.0
        %697 = vmatpush2.msra.mxu0 0.0
        %698 = vmatprep.subr.mxu0 0.0
        %699 = vmatpush2.msra.mxu0 0.0
        %700 = vmatprep.subr.mxu0 0.0
        %701 = vmatpush2.msra.mxu0 0.0
        %702 = vmatprep.subr.mxu0 0.0
        %703 = vmatpush2.msra.mxu0 0.0
        %704 = vmatprep.subr.mxu0 0.0
        %705 = vmatpush2.msra.mxu0 0.0
        %706 = vmatprep.subr.mxu0 0.0
        %707 = vmatpush2.msra.mxu0 0.0
        %708 = vmatprep.subr.mxu0 0.0
        %709 = vmatpush2.msra.mxu0 0.0
        %710 = vmatprep.subr.mxu0 0.0
        %711 = vmatpush2.msra.mxu0 0.0
        %712 = vmatprep.subr.mxu0 0.0
        %713 = vmatpush2.msra.mxu0 0.0
        %714 = vmatprep.subr.mxu0 0.0
        %715 = vmatpush2.msra.mxu0 0.0
        %716 = vmatprep.subr.mxu0 0.0
        %717 = vmatpush2.msra.mxu0 0.0
        %718 = vmatprep.subr.mxu0 0.0
        %719 = vmatpush2.msra.mxu0 0.0
        %720 = vmatprep.subr.mxu0 0.0
        %721 = vmatpush2.msra.mxu0 0.0
        %722 = vmatprep.mubr.f32.mxu0 0.0
        %723 = vmatmul.mubr.f32.gmra.mxu0 %v646
        %v724 = vpop.f32.mrf.mxu0
        %v725 = vadd.f32 %v642, %v724
        %v726 = vpop.f32.mrf.mxu0
        %v727 = vadd.f32 %v642, %v726
        %728 = vdwg.mxu0
        %729 = vmatprep.subr.mxu0 0.0
        %730 = vmatpush1.msra.mxu0 0.0
        %731 = vmatprep.subr.mxu0 0.0
        %732 = vmatpush1.msra.mxu0 0.0
        %733 = vmatprep.subr.mxu0 0.0
        %734 = vmatpush1.msra.mxu0 0.0
        %735 = vmatprep.subr.mxu0 0.0
        %736 = vmatpush1.msra.mxu0 0.0
        %737 = vmatprep.subr.mxu0 0.0
        %738 = vmatpush1.msra.mxu0 0.0
        %739 = vmatprep.subr.mxu0 0.0
        %740 = vmatpush1.msra.mxu0 0.0
        %741 = vmatprep.subr.mxu0 0.0
        %742 = vmatpush1.msra.mxu0 0.0
        %743 = vmatprep.subr.mxu0 0.0
        %744 = vmatpush1.msra.mxu0 0.0
        %745 = vmatprep.subr.mxu0 0.0
        %746 = vmatpush1.msra.mxu0 0.0
        %747 = vmatprep.subr.mxu0 0.0
        %748 = vmatpush1.msra.mxu0 0.0
        %749 = vmatprep.subr.mxu0 0.0
        %750 = vmatpush1.msra.mxu0 0.0
        %751 = vmatprep.subr.mxu0 0.0
        %752 = vmatpush1.msra.mxu0 0.0
        %753 = vmatprep.subr.mxu0 0.0
        %754 = vmatpush1.msra.mxu0 0.0
        %755 = vmatprep.subr.mxu0 0.0
        %756 = vmatpush1.msra.mxu0 0.0
        %757 = vmatprep.subr.mxu0 0.0
        %758 = vmatpush1.msra.mxu0 %v656
        %759 = vmatprep.subr.mxu0 0.0
        %760 = vmatpush1.msra.mxu0 %v633
        %761 = vmatprep.subr.mxu0 0.0
        %762 = vmatpush2.msra.mxu0 0.0
        %763 = vmatprep.subr.mxu0 0.0
        %764 = vmatpush2.msra.mxu0 0.0
        %765 = vmatprep.subr.mxu0 0.0
        %766 = vmatpush2.msra.mxu0 0.0
        %767 = vmatprep.subr.mxu0 0.0
        %768 = vmatpush2.msra.mxu0 0.0
        %769 = vmatprep.subr.mxu0 0.0
        %770 = vmatpush2.msra.mxu0 0.0
        %771 = vmatprep.subr.mxu0 0.0
        %772 = vmatpush2.msra.mxu0 0.0
        %773 = vmatprep.subr.mxu0 0.0
        %774 = vmatpush2.msra.mxu0 0.0
        %775 = vmatprep.subr.mxu0 0.0
        %776 = vmatpush2.msra.mxu0 0.0
        %777 = vmatprep.subr.mxu0 0.0
        %778 = vmatpush2.msra.mxu0 0.0
        %779 = vmatprep.subr.mxu0 0.0
        %780 = vmatpush2.msra.mxu0 0.0
        %781 = vmatprep.subr.mxu0 0.0
        %782 = vmatpush2.msra.mxu0 0.0
        %783 = vmatprep.subr.mxu0 0.0
        %784 = vmatpush2.msra.mxu0 0.0
        %785 = vmatprep.subr.mxu0 0.0
        %786 = vmatpush2.msra.mxu0 0.0
        %787 = vmatprep.subr.mxu0 0.0
        %788 = vmatpush2.msra.mxu0 0.0
        %789 = vmatprep.subr.mxu0 0.0
        %790 = vmatpush2.msra.mxu0 0.0
        %791 = vmatprep.subr.mxu0 0.0
        %792 = vmatpush2.msra.mxu0 0.0
        %793 = vmatprep.mubr.f32.mxu0 0.0
        %794 = vmatmul.mubr.f32.gmra.mxu0 %v646
        %v795 = vpop.f32.mrf.mxu0
        %v796 = vadd.f32 %v642, %v795
        %v797 = vpop.f32.mrf.mxu0
        %798 = vdwg.mxu0
        %799 = vst [vmem:[%s259] sm:$0x1f] %v725
        %800 = vst [vmem:[%s259 + $0x8] sm:$0x1f] %v727
        %vm801 = vcmask 258048
        %802 = vst.msk [vmem:[%s259 + $0x10] sm:$0x1f] %vm801, %v796
        %p803 = scmp.lt.s32.totalorder %s20, 1
        %s804 = scalar_select %p803, %s20, 1
        %s805 = smul.addr %s804, 3
        %s806 = smul.addr %s805, 8
        %s807 = scalar_lea.vmem %s5, %s806
        // Predicated region
        $region49: #{tpu_custom_call.1} parent=39 // pred_check
          %p808 = pneg %p148
        $region50: #{tpu_custom_call.1} parent=39 // pred_check_branch
          %810 = sbr.rel (%p808) target = $region52
        $region51: #{tpu_custom_call.1} parent=39 // pred_region
          _
        $region52: #{tpu_custom_call.1} parent=39 // pred_fallthru
          _
      $region40: #{tpu_custom_call.1} parent=5 // pred_fallthru
        _
      %p811 = scmp.le.s32.totalorder 2, %s15
      // Predicated region
      $region53: #{tpu_custom_call.1} parent=5 // pred_check
        %p812 = pneg %p811
      $region54: #{tpu_custom_call.1} parent=5 // pred_check_branch
        %814 = sbr.rel (%p812) target = $region56
      $region55: #{tpu_custom_call.1} parent=5 // pred_region
        %s815 = ssub.s32 %s15, 2
        // Predicated region
        $region57: #{tpu_custom_call.1} parent=55 // pred_check
          %p816 = pneg %p154
        $region58: #{tpu_custom_call.1} parent=55 // pred_check_branch
          %818 = sbr.rel (%p816) target = $region60
        $region59: #{tpu_custom_call.1} parent=55 // pred_region
          %p819 = scmp.lt.s32.totalorder %s21, 1
          %s820 = scalar_select %p819, %s21, 1
          %s821 = smul.addr %s820, 3
          %s822 = smul.addr %s821, 8
          %s823 = scalar_lea.vmem %s5, %s822
        $region60: #{tpu_custom_call.1} parent=55 // pred_fallthru
          _
      $region56: #{tpu_custom_call.1} parent=5 // pred_fallthru
        _
    $region6: #{tpu_custom_call.1} parent=1 // loop_footer
      %s19 = sadd.s32 1, %s15
    $region7: #{tpu_custom_call.1} parent=1 // loop_footer_branch
      %14 = sbr.rel target = $region3
    $region8: #{tpu_custom_call.1} parent=1 // loop_exit
      _
    %824 = vsyncpa [#allocation3], 1
    %s825 = scalar_lea.sflag [#allocation3], 1
    %826 = vsyncpa %s825, 1
    %827 = vsyncpa [#allocation5], 1

</llo_original>
